<compile_context>
chip_gen: v7x
topology: tpu7x:2x2x1
jax: 0.10.0
libtpu: 0.0.40
codegen_flags: <defaults>
</compile_context>

<pallas_src>
import functools

import jax
import jax.numpy as jnp
from jax.experimental import pallas as pl
from jax.experimental.pallas import tpu as pltpu


def _round_up(v, m):
    return ((v + m - 1) // m) * m


def _mlp_kernel(x_ref, w1_ref, b1_ref, w2_ref, b2_ref, w3_ref, b3_ref, o_ref):
    # f32 x tile arrives via the pipelined DMA; cast to bf16 on the VPU here so
    # the wrapper does not need a separate HBM cast pass over x.
    x = x_ref[...].astype(jnp.bfloat16)

    h1 = jnp.dot(x, w1_ref[...], preferred_element_type=jnp.float32) + b1_ref[...]
    h1 = jnp.maximum(h1, 0.0).astype(jnp.bfloat16)      # bf16 temp, f32 accum stays in dots

    h2 = jnp.dot(h1, w2_ref[...], preferred_element_type=jnp.float32) + b2_ref[...]
    h2 = jnp.maximum(h2, 0.0).astype(jnp.bfloat16)

    out = jnp.dot(h2, w3_ref[...], preferred_element_type=jnp.float32) + b3_ref[...]
    o_ref[...] = out.astype(o_ref.dtype)


# Conservative per-row VMEM budget: x f32 (128-lane padded, double-buffered)
# + out f32 (double-buffered) + f32/bf16 hidden temporaries  ~= 3.5 KB; use 4 KB.
_BYTES_PER_ROW_VMEM = 4096
_RESIDENT_BYTES = 2 << 20      # resident weights/biases + misc headroom


def _vmem_limit_bytes():
    try:
        cap = int(pltpu.get_tpu_info().vmem_capacity_bytes)
    except Exception:
        cap = 64 << 20         # assume the smallest per-core VMEM (v7x) if query fails
    # ~46 MiB on v7x (64 MiB physical VMEM), capped at 96 MiB on v5e/v6e (128 MiB).
    return min(int(cap * 0.72), 96 << 20)


def _pick_batch_tile(B, vmem_limit):
    tb_cap = (vmem_limit - _RESIDENT_BYTES) // _BYTES_PER_ROW_VMEM
    tb_cap = max(16, min((tb_cap // 16) * 16, 16384))
    if B <= 4096:
        # Tiny/small batches: a single (or few) tile(s); no point splitting.
        return min(_round_up(B, 8), tb_cap)
    # Large batches: at least 2 grid steps, and an even number of steps so the
    # "parallel" batch axis splits evenly across both v7x TensorCores.
    n_steps = max(2, pl.cdiv(B, tb_cap))
    if n_steps % 2:
        n_steps += 1
    return max(16, _round_up(pl.cdiv(B, n_steps), 16))


@functools.partial(jax.jit, static_argnames=("block_b", "out_dtype"))
def action_model_forward(x, params, *, block_b=None, out_dtype=jnp.float32):
    """Forward pass of ActionModel.

    x: (B, input_dim) float32.
    params: dict with w1 (in,64), b1 (1,64), w2 (64,64), b2 (1,64),
            w3 (64,action_dim), b3 (1,action_dim) — all float32.
    Returns (B, action_dim) in out_dtype (default float32; pass jnp.bfloat16 to
    halve output HBM traffic if downstream tolerates it).
    """
    B, input_dim = x.shape
    hidden = params["w1"].shape[1]
    action_dim = params["w3"].shape[1]

    vmem_limit = _vmem_limit_bytes()
    if block_b is None:
        tb = _pick_batch_tile(B, vmem_limit)
    else:
        tb = max(8, _round_up(int(block_b), 8))

    # Ragged last block is masked by Pallas (OOB rows read garbage, writes dropped).
    grid = (pl.cdiv(B, tb),)

    # bf16 weights (native MXU path; ~23 KB one-time cast); f32 biases.
    w1 = params["w1"].astype(jnp.bfloat16)
    w2 = params["w2"].astype(jnp.bfloat16)
    w3 = params["w3"].astype(jnp.bfloat16)
    b1 = params["b1"].astype(jnp.float32)
    b2 = params["b2"].astype(jnp.float32)
    b3 = params["b3"].astype(jnp.float32)

    # Grid-invariant constants: single-buffered, stay resident across all steps.
    def fixed(shape):
        return pl.BlockSpec(shape, lambda i: (0, 0), pipeline_mode=pl.Buffered(1))

    flops = 2 * B * (input_dim * hidden + hidden * hidden + hidden * action_dim)
    out_bytes = 2 if out_dtype == jnp.bfloat16 else 4
    bytes_accessed = (
        B * input_dim * 4                                                    # x (f32)
        + (input_dim * hidden + hidden * hidden + hidden * action_dim) * 2   # weights (bf16)
        + (2 * hidden + action_dim) * 4                                      # biases
        + B * action_dim * out_bytes                                         # out
    )

    out = pl.pallas_call(
        _mlp_kernel,
        out_shape=jax.ShapeDtypeStruct((B, action_dim), out_dtype),
        grid=grid,
        in_specs=[
            pl.BlockSpec((tb, input_dim), lambda i: (i, 0)),     # x tile (pipelined, f32)
            fixed((input_dim, hidden)),                          # w1
            fixed((1, hidden)),                                  # b1
            fixed((hidden, hidden)),                             # w2
            fixed((1, hidden)),                                  # b2
            fixed((hidden, action_dim)),                         # w3
            fixed((1, action_dim)),                              # b3
        ],
        out_specs=pl.BlockSpec((tb, action_dim), lambda i: (i, 0)),
        compiler_params=pltpu.CompilerParams(
            dimension_semantics=("parallel",),
            vmem_limit_bytes=vmem_limit,
        ),
        cost_estimate=pl.CostEstimate(
            flops=flops, transcendentals=0, bytes_accessed=bytes_accessed),
    )(x, w1, b1, w2, b2, w3, b3)

    return out


def init_params(key, input_dim=10, hidden=64, action_dim=12):
    """Deterministic synthetic init mirroring nn.Linear's U(-1/sqrt(fan_in), 1/sqrt(fan_in))."""
    ks = jax.random.split(key, 6)

    def linear(kw, kb, fan_in, fan_out):
        bound = 1.0 / jnp.sqrt(jnp.float32(fan_in))
        # stored as (in, out) == PyTorch weight (out, in) transposed
        w = jax.random.uniform(kw, (fan_in, fan_out), jnp.float32, -bound, bound)
        b = jax.random.uniform(kb, (1, fan_out), jnp.float32, -bound, bound)
        return w, b

    w1, b1 = linear(ks[0], ks[1], input_dim, hidden)
    w2, b2 = linear(ks[2], ks[3], hidden, hidden)
    w3, b3 = linear(ks[4], ks[5], hidden, action_dim)
    return {"w1": w1, "b1": b1, "w2": w2, "b2": b2, "w3": w3, "b3": b3}


def reference_forward(x, p):
    h1 = jnp.maximum(x @ p["w1"] + p["b1"], 0.0)
    h2 = jnp.maximum(h1 @ p["w2"] + p["b2"], 0.0)
    return h2 @ p["w3"] + p["b3"]


if __name__ == "__main__":
    key = jax.random.PRNGKey(0)
    k_params, k_x = jax.random.split(key)

    input_dim, hidden, action_dim = 10, 64, 12
    batch = 8

    params = init_params(k_params, input_dim, hidden, action_dim)
    x = jax.random.normal(k_x, (batch, input_dim), jnp.float32)

    out = action_model_forward(x, params)
    out = jax.block_until_ready(out)

    ref = reference_forward(x, params)
    assert out.shape == (batch, action_dim), out.shape
    # bf16 weights / bf16 MXU inputs: widen tolerance vs the f32 reference.
    assert jnp.allclose(out, ref, atol=5e-2, rtol=5e-2), "mismatch vs JAX reference"

    print("KERNEL_OK")
</pallas_src>

<mosaic_0001>
module attributes {stable_mosaic.version = 11 : i64} {
  func.func @_mlp_kernel(%arg0: i32, %arg1: memref<8x10xf32, #tpu.memory_space<vmem>>, %arg2: memref<10x64xbf16, #tpu.memory_space<vmem>>, %arg3: memref<1x64xf32, #tpu.memory_space<vmem>>, %arg4: memref<64x64xbf16, #tpu.memory_space<vmem>>, %arg5: memref<1x64xf32, #tpu.memory_space<vmem>>, %arg6: memref<64x12xbf16, #tpu.memory_space<vmem>>, %arg7: memref<1x12xf32, #tpu.memory_space<vmem>>, %arg8: memref<8x12xf32, #tpu.memory_space<vmem>>) attributes {dimension_semantics = [#tpu.dimension_semantics<parallel>], iteration_bounds = array<i64: 1>, scalar_prefetch = 0 : i64, scratch_operands = 0 : i64, tpu.core_type = #tpu.core_type<tc>, window_params = [{transform_indices = @transform_0, window_bounds = array<i64: 8, 10>}, {pipeline_mode = #tpu.pipeline_mode<synchronous>, transform_indices = @transform_1, window_bounds = array<i64: 10, 64>}, {pipeline_mode = #tpu.pipeline_mode<synchronous>, transform_indices = @transform_2, window_bounds = array<i64: 1, 64>}, {pipeline_mode = #tpu.pipeline_mode<synchronous>, transform_indices = @transform_3, window_bounds = array<i64: 64, 64>}, {pipeline_mode = #tpu.pipeline_mode<synchronous>, transform_indices = @transform_4, window_bounds = array<i64: 1, 64>}, {pipeline_mode = #tpu.pipeline_mode<synchronous>, transform_indices = @transform_5, window_bounds = array<i64: 64, 12>}, {pipeline_mode = #tpu.pipeline_mode<synchronous>, transform_indices = @transform_6, window_bounds = array<i64: 1, 12>}, {transform_indices = @transform_7, window_bounds = array<i64: 8, 12>}]} {
    %c0 = arith.constant 0 : index
    %c0_0 = arith.constant 0 : index
    %0 = vector.load %arg1[%c0, %c0_0] : memref<8x10xf32, #tpu.memory_space<vmem>>, vector<8x10xf32>
    %1 = arith.truncf %0 : vector<8x10xf32> to vector<8x10xbf16>
    %c0_1 = arith.constant 0 : index
    %c0_2 = arith.constant 0 : index
    %2 = vector.load %arg2[%c0_1, %c0_2] : memref<10x64xbf16, #tpu.memory_space<vmem>>, vector<10x64xbf16>
    %cst = arith.constant dense<0.000000e+00> : vector<8x64xf32>
    %3 = tpu.matmul %1, %2, %cst {dimension_numbers = #tpu.dot_dimension_numbers<[1], [0], [0], [1], [0, 0, 1, 1], [], []>} : vector<8x10xbf16>, vector<10x64xbf16>, vector<8x64xf32> -> vector<8x64xf32>
    %c0_3 = arith.constant 0 : index
    %c0_4 = arith.constant 0 : index
    %4 = vector.load %arg3[%c0_3, %c0_4] : memref<1x64xf32, #tpu.memory_space<vmem>>, vector<1x64xf32>
    %5 = vector.broadcast %4 : vector<1x64xf32> to vector<8x64xf32>
    %6 = arith.addf %3, %5 : vector<8x64xf32>
    %cst_5 = arith.constant 0.000000e+00 : f32
    %7 = vector.broadcast %cst_5 : f32 to vector<8x64xf32>
    %8 = arith.maximumf %6, %7 : vector<8x64xf32>
    %9 = arith.truncf %8 : vector<8x64xf32> to vector<8x64xbf16>
    %c0_6 = arith.constant 0 : index
    %c0_7 = arith.constant 0 : index
    %10 = vector.load %arg4[%c0_6, %c0_7] : memref<64x64xbf16, #tpu.memory_space<vmem>>, vector<64x64xbf16>
    %cst_8 = arith.constant dense<0.000000e+00> : vector<8x64xf32>
    %11 = tpu.matmul %9, %10, %cst_8 {dimension_numbers = #tpu.dot_dimension_numbers<[1], [0], [0], [1], [0, 0, 1, 1], [], []>} : vector<8x64xbf16>, vector<64x64xbf16>, vector<8x64xf32> -> vector<8x64xf32>
    %c0_9 = arith.constant 0 : index
    %c0_10 = arith.constant 0 : index
    %12 = vector.load %arg5[%c0_9, %c0_10] : memref<1x64xf32, #tpu.memory_space<vmem>>, vector<1x64xf32>
    %13 = vector.broadcast %12 : vector<1x64xf32> to vector<8x64xf32>
    %14 = arith.addf %11, %13 : vector<8x64xf32>
    %cst_11 = arith.constant 0.000000e+00 : f32
    %15 = vector.broadcast %cst_11 : f32 to vector<8x64xf32>
    %16 = arith.maximumf %14, %15 : vector<8x64xf32>
    %17 = arith.truncf %16 : vector<8x64xf32> to vector<8x64xbf16>
    %c0_12 = arith.constant 0 : index
    %c0_13 = arith.constant 0 : index
    %18 = vector.load %arg6[%c0_12, %c0_13] : memref<64x12xbf16, #tpu.memory_space<vmem>>, vector<64x12xbf16>
    %cst_14 = arith.constant dense<0.000000e+00> : vector<8x12xf32>
    %19 = tpu.matmul %17, %18, %cst_14 {dimension_numbers = #tpu.dot_dimension_numbers<[1], [0], [0], [1], [0, 0, 1, 1], [], []>} : vector<8x64xbf16>, vector<64x12xbf16>, vector<8x12xf32> -> vector<8x12xf32>
    %c0_15 = arith.constant 0 : index
    %c0_16 = arith.constant 0 : index
    %20 = vector.load %arg7[%c0_15, %c0_16] : memref<1x12xf32, #tpu.memory_space<vmem>>, vector<1x12xf32>
    %21 = vector.broadcast %20 : vector<1x12xf32> to vector<8x12xf32>
    %22 = arith.addf %19, %21 : vector<8x12xf32>
    %c0_17 = arith.constant 0 : index
    %c0_18 = arith.constant 0 : index
    %23 = vector.load %arg8[%c0_17, %c0_18] : memref<8x12xf32, #tpu.memory_space<vmem>>, vector<8x12xf32>
    tpu.vector_store %arg8[%c0_17, %c0_18], %22 {strides = array<i32>} : memref<8x12xf32, #tpu.memory_space<vmem>>, vector<8x12xf32>,
    return
  }
  func.func @transform_0(%arg0: i32) -> (i32, i32) {
    %c0_i32 = arith.constant 0 : i32
    %c0_i32_0 = arith.constant 0 : i32
    return %arg0, %c0_i32 : i32, i32
  }
  func.func @transform_1(%arg0: i32) -> (i32, i32) {
    %c0_i32 = arith.constant 0 : i32
    %c0_i32_0 = arith.constant 0 : i32
    %c0_i32_1 = arith.constant 0 : i32
    return %c0_i32, %c0_i32_0 : i32, i32
  }
  func.func @transform_2(%arg0: i32) -> (i32, i32) {
    %c0_i32 = arith.constant 0 : i32
    %c0_i32_0 = arith.constant 0 : i32
    %c0_i32_1 = arith.constant 0 : i32
    return %c0_i32, %c0_i32_0 : i32, i32
  }
  func.func @transform_3(%arg0: i32) -> (i32, i32) {
    %c0_i32 = arith.constant 0 : i32
    %c0_i32_0 = arith.constant 0 : i32
    %c0_i32_1 = arith.constant 0 : i32
    return %c0_i32, %c0_i32_0 : i32, i32
  }
  func.func @transform_4(%arg0: i32) -> (i32, i32) {
    %c0_i32 = arith.constant 0 : i32
    %c0_i32_0 = arith.constant 0 : i32
    %c0_i32_1 = arith.constant 0 : i32
    return %c0_i32, %c0_i32_0 : i32, i32
  }
  func.func @transform_5(%arg0: i32) -> (i32, i32) {
    %c0_i32 = arith.constant 0 : i32
    %c0_i32_0 = arith.constant 0 : i32
    %c0_i32_1 = arith.constant 0 : i32
    return %c0_i32, %c0_i32_0 : i32, i32
  }
  func.func @transform_6(%arg0: i32) -> (i32, i32) {
    %c0_i32 = arith.constant 0 : i32
    %c0_i32_0 = arith.constant 0 : i32
    %c0_i32_1 = arith.constant 0 : i32
    return %c0_i32, %c0_i32_0 : i32, i32
  }
  func.func @transform_7(%arg0: i32) -> (i32, i32) {
    %c0_i32 = arith.constant 0 : i32
    %c0_i32_0 = arith.constant 0 : i32
    return %arg0, %c0_i32 : i32, i32
  }
}

</mosaic_0001>

<llo_original>
// kernel: action_model_forward.1
$region0: #{action_model_forward.1}
  #allocation0 [shape = 'u32[]', space=smem, size = 0x4, offset = 0x4, fixed_abs, tag = 'smem constant byte address 0x4 - core index']
  #allocation1 [shape = 'u32[144,128]{1,0:T(1,128)}', space=vmem, size = 0x12000, scoped, tag = 'internal scratch']
  %s0 = inlined_call_operand.vmem [shape: f32[8,10], index: 0, kind: input, shape index: {}]
  %s1 = inlined_call_operand.vmem [shape: bf16[10,64], index: 1, kind: input, shape index: {}]
  %s2 = inlined_call_operand.vmem [shape: f32[1,64], index: 2, kind: input, shape index: {}]
  %s3 = inlined_call_operand.vmem [shape: bf16[64,64], index: 3, kind: input, shape index: {}]
  %s4 = inlined_call_operand.vmem [shape: f32[1,64], index: 4, kind: input, shape index: {}]
  %s5 = inlined_call_operand.vmem [shape: bf16[64,12], index: 5, kind: input, shape index: {}]
  %s6 = inlined_call_operand.vmem [shape: f32[1,12], index: 6, kind: input, shape index: {}]
  %s7 = inlined_call_operand.hbm [shape: f32[8,12], index: 7, kind: output, shape index: {}]
  %s8 = sld [smem:[#allocation0]]
  $region38: #{action_model_forward.1} parent=0
    _
  %s10 = ssub.s32 1, %s8
  %s11 = scalar_select 0, %s10, %s8
  $region1: #{action_model_forward.1} parent=0
    #allocation2 [shape = 'u8[4096]{0}', space=vmem, size = 0x1000, scoped, tag = 'output window, operand 0, single buffered']
    #allocation3 [shape = 's32[1]{0}', space=sflag, size = 0x4, scoped, tag = 'scoped memory for action_model_forward.1']
    %12 = vsyncpa [#allocation3], 0
    // Predicated region
    $region2: #{action_model_forward.1} parent=1 // pred_check
      _
    $region3: #{action_model_forward.1} parent=1 // pred_check_branch
      %14 = sbr.rel (0) target = $region5
    $region4: #{action_model_forward.1} parent=1 // pred_region
      _
    $region5: #{action_model_forward.1} parent=1 // pred_fallthru
      _
    // Predicated region
    $region6: #{action_model_forward.1} parent=1 // pred_check
      _
    $region7: #{action_model_forward.1} parent=1 // pred_check_branch
      %16 = sbr.rel (0) target = $region9
    $region8: #{action_model_forward.1} parent=1 // pred_region
      _
    $region9: #{action_model_forward.1} parent=1 // pred_fallthru
      _
    // Predicated region
    $region10: #{action_model_forward.1} parent=1 // pred_check
      _
    $region11: #{action_model_forward.1} parent=1 // pred_check_branch
      %18 = sbr.rel (0) target = $region13
    $region12: #{action_model_forward.1} parent=1 // pred_region
      _
    $region13: #{action_model_forward.1} parent=1 // pred_fallthru
      _
    // Predicated region
    $region14: #{action_model_forward.1} parent=1 // pred_check
      _
    $region15: #{action_model_forward.1} parent=1 // pred_check_branch
      %20 = sbr.rel (0) target = $region17
    $region16: #{action_model_forward.1} parent=1 // pred_region
      _
    $region17: #{action_model_forward.1} parent=1 // pred_fallthru
      _
    // Predicated region
    $region18: #{action_model_forward.1} parent=1 // pred_check
      _
    $region19: #{action_model_forward.1} parent=1 // pred_check_branch
      %22 = sbr.rel (0) target = $region21
    $region20: #{action_model_forward.1} parent=1 // pred_region
      _
    $region21: #{action_model_forward.1} parent=1 // pred_fallthru
      _
    // Predicated region
    $region22: #{action_model_forward.1} parent=1 // pred_check
      _
    $region23: #{action_model_forward.1} parent=1 // pred_check_branch
      %24 = sbr.rel (0) target = $region25
    $region24: #{action_model_forward.1} parent=1 // pred_region
      _
    $region25: #{action_model_forward.1} parent=1 // pred_fallthru
      _
    // Predicated region
    $region26: #{action_model_forward.1} parent=1 // pred_check
      _
    $region27: #{action_model_forward.1} parent=1 // pred_check_branch
      %26 = sbr.rel (0) target = $region29
    $region28: #{action_model_forward.1} parent=1 // pred_region
      _
    $region29: #{action_model_forward.1} parent=1 // pred_fallthru
      _
    %v28 = vld [vmem:[%s0] sm:$0xff]
    %v29 = vpack.c.bf16 %v28, %v28
    %v30 = vld [vmem:[%s1] sm:$0xf]
    %v31 = vld [vmem:[%s1 + $0x4] sm:$0x1]
    %v32 = vld [vmem:[%s2] sm:$0x1]
    %v34 = vlaneseq
    %v35 = vshrl.u32 %v34, 7
    %v36 = vsub.s32 0, %v35
    %v37 = vrot.slane %v32, %v36
    %v41 = vunpack.c.l.b16 %v30
    %v42 = vunpack.c.l.b16 %v31
    %v43 = vpack.c.b16 %v42, %v41
    %vm44 = vcmask 80896
    %v46 = vsel %vm44, %v29, 0
    %vm48 = vcmask 1044480
    %v50 = vsel %vm48, %v43, 0
    %52 = vmatprep.subr.bf16.mxu0 0
    %53 = vmatpush1.bf16.msra.mxu0 %v50
    %54 = vmatprep.subr.bf16.mxu0 0
    %55 = vmatpush1.bf16.msra.mxu0 0
    %56 = vmatprep.subr.bf16.mxu0 0
    %57 = vmatpush1.bf16.msra.mxu0 0
    %58 = vmatprep.subr.bf16.mxu0 0
    %59 = vmatpush1.bf16.msra.mxu0 0
    %60 = vmatprep.subr.bf16.mxu0 0
    %61 = vmatpush1.bf16.msra.mxu0 0
    %62 = vmatprep.subr.bf16.mxu0 0
    %63 = vmatpush1.bf16.msra.mxu0 0
    %64 = vmatprep.subr.bf16.mxu0 0
    %65 = vmatpush1.bf16.msra.mxu0 0
    %66 = vmatprep.subr.bf16.mxu0 0
    %67 = vmatpush1.bf16.msra.mxu0 0
    %68 = vmatprep.subr.bf16.mxu0 0
    %69 = vmatpush1.bf16.msra.mxu0 0
    %70 = vmatprep.subr.bf16.mxu0 0
    %71 = vmatpush1.bf16.msra.mxu0 0
    %72 = vmatprep.subr.bf16.mxu0 0
    %73 = vmatpush1.bf16.msra.mxu0 0
    %74 = vmatprep.subr.bf16.mxu0 0
    %75 = vmatpush1.bf16.msra.mxu0 0
    %76 = vmatprep.subr.bf16.mxu0 0
    %77 = vmatpush1.bf16.msra.mxu0 0
    %78 = vmatprep.subr.bf16.mxu0 0
    %79 = vmatpush1.bf16.msra.mxu0 0
    %80 = vmatprep.subr.bf16.mxu0 0
    %81 = vmatpush1.bf16.msra.mxu0 0
    %82 = vmatprep.subr.bf16.mxu0 0
    %83 = vmatpush1.bf16.msra.mxu0 0
    %84 = vmatprep.mubr.bf16.mxu0 0
    %85 = vmatmul.mubr.bf16.gmra.mrb[0].mxu0 %v46
    %v86 = vpop.f32.mrb[0].mxu0
    %v87 = vadd.f32 %v37, %v86
    %v88 = vpop.f32.mrb[0].mxu0
    %v89 = vpop.f32.mrb[0].mxu0
    %v90 = vpop.f32.mrb[0].mxu0
    %91 = vdwg.mxu0
    %v92 = vmax.f32 %v87, 0.0
    %v93 = vpack.c.bf16 %v92, %v92
    %v94 = vld [vmem:[%s3] sm:$0xf]
    %v95 = vld [vmem:[%s3 + $0x4] sm:$0xf]
    %v96 = vld [vmem:[%s3 + $0x8] sm:$0xf]
    %v97 = vld [vmem:[%s3 + $0xc] sm:$0xf]
    %v98 = vld [vmem:[%s3 + $0x10] sm:$0xf]
    %v99 = vld [vmem:[%s3 + $0x14] sm:$0xf]
    %v100 = vld [vmem:[%s3 + $0x18] sm:$0xf]
    %v101 = vld [vmem:[%s3 + $0x1c] sm:$0xf]
    %v102 = vld [vmem:[%s4] sm:$0x1]
    %v104 = vlaneseq
    %v105 = vshrl.u32 %v104, 7
    %v106 = vsub.s32 0, %v105
    %v107 = vrot.slane %v102, %v106
    %v117 = vunpack.c.l.b16 %v94
    %v118 = vunpack.c.l.b16 %v95
    %v119 = vunpack.c.l.b16 %v96
    %v120 = vunpack.c.l.b16 %v97
    %v121 = vunpack.c.l.b16 %v98
    %v122 = vunpack.c.l.b16 %v99
    %v123 = vunpack.c.l.b16 %v100
    %v124 = vunpack.c.l.b16 %v101
    %v125 = vpack.c.b16 %v118, %v117
    %v126 = vpack.c.b16 %v120, %v119
    %v127 = vpack.c.b16 %v122, %v121
    %v128 = vpack.c.b16 %v124, %v123
    %vm133 = vcmask 523264
    %v135 = vsel %vm133, %v93, 0
    %137 = vmatprep.subr.bf16.mxu0 0
    %138 = vmatpush1.bf16.msra.mxu0 %v125
    %139 = vmatprep.subr.bf16.mxu0 0
    %140 = vmatpush1.bf16.msra.mxu0 %v126
    %141 = vmatprep.subr.bf16.mxu0 0
    %142 = vmatpush1.bf16.msra.mxu0 %v127
    %143 = vmatprep.subr.bf16.mxu0 0
    %144 = vmatpush1.bf16.msra.mxu0 %v128
    %145 = vmatprep.subr.bf16.mxu0 0
    %146 = vmatpush1.bf16.msra.mxu0 0
    %147 = vmatprep.subr.bf16.mxu0 0
    %148 = vmatpush1.bf16.msra.mxu0 0
    %149 = vmatprep.subr.bf16.mxu0 0
    %150 = vmatpush1.bf16.msra.mxu0 0
    %151 = vmatprep.subr.bf16.mxu0 0
    %152 = vmatpush1.bf16.msra.mxu0 0
    %153 = vmatprep.subr.bf16.mxu0 0
    %154 = vmatpush1.bf16.msra.mxu0 0
    %155 = vmatprep.subr.bf16.mxu0 0
    %156 = vmatpush1.bf16.msra.mxu0 0
    %157 = vmatprep.subr.bf16.mxu0 0
    %158 = vmatpush1.bf16.msra.mxu0 0
    %159 = vmatprep.subr.bf16.mxu0 0
    %160 = vmatpush1.bf16.msra.mxu0 0
    %161 = vmatprep.subr.bf16.mxu0 0
    %162 = vmatpush1.bf16.msra.mxu0 0
    %163 = vmatprep.subr.bf16.mxu0 0
    %164 = vmatpush1.bf16.msra.mxu0 0
    %165 = vmatprep.subr.bf16.mxu0 0
    %166 = vmatpush1.bf16.msra.mxu0 0
    %167 = vmatprep.subr.bf16.mxu0 0
    %168 = vmatpush1.bf16.msra.mxu0 0
    %169 = vmatprep.mubr.bf16.mxu0 0
    %170 = vmatmul.mubr.bf16.gmra.mrb[0].mxu0 %v135
    %v171 = vpop.f32.mrb[0].mxu0
    %v172 = vadd.f32 %v107, %v171
    %v173 = vpop.f32.mrb[0].mxu0
    %v174 = vpop.f32.mrb[0].mxu0
    %v175 = vpop.f32.mrb[0].mxu0
    %176 = vdwg.mxu0
    %v177 = vmax.f32 %v172, 0.0
    %v178 = vpack.c.bf16 %v177, %v177
    %v179 = vld [vmem:[%s5] sm:$0xf]
    %v180 = vld [vmem:[%s5 + $0x4] sm:$0xf]
    %v181 = vld [vmem:[%s5 + $0x8] sm:$0xf]
    %v182 = vld [vmem:[%s5 + $0xc] sm:$0xf]
    %v183 = vld [vmem:[%s5 + $0x10] sm:$0xf]
    %v184 = vld [vmem:[%s5 + $0x14] sm:$0xf]
    %v185 = vld [vmem:[%s5 + $0x18] sm:$0xf]
    %v186 = vld [vmem:[%s5 + $0x1c] sm:$0xf]
    %v187 = vld [vmem:[%s6] sm:$0x1]
    %v189 = vlaneseq
    %v190 = vshrl.u32 %v189, 7
    %v191 = vsub.s32 0, %v190
    %v192 = vrot.slane %v187, %v191
    %v202 = vunpack.c.l.b16 %v179
    %v203 = vunpack.c.l.b16 %v180
    %v204 = vunpack.c.l.b16 %v181
    %v205 = vunpack.c.l.b16 %v182
    %v206 = vunpack.c.l.b16 %v183
    %v207 = vunpack.c.l.b16 %v184
    %v208 = vunpack.c.l.b16 %v185
    %v209 = vunpack.c.l.b16 %v186
    %v210 = vpack.c.b16 %v203, %v202
    %v211 = vpack.c.b16 %v205, %v204
    %v212 = vpack.c.b16 %v207, %v206
    %v213 = vpack.c.b16 %v209, %v208
    %v219 = vsel %vm133, %v178, 0
    %221 = vmatprep.subr.bf16.mxu0 0
    %222 = vmatpush1.bf16.msra.mxu0 %v210
    %223 = vmatprep.subr.bf16.mxu0 0
    %224 = vmatpush1.bf16.msra.mxu0 %v211
    %225 = vmatprep.subr.bf16.mxu0 0
    %226 = vmatpush1.bf16.msra.mxu0 %v212
    %227 = vmatprep.subr.bf16.mxu0 0
    %228 = vmatpush1.bf16.msra.mxu0 %v213
    %229 = vmatprep.subr.bf16.mxu0 0
    %230 = vmatpush1.bf16.msra.mxu0 0
    %231 = vmatprep.subr.bf16.mxu0 0
    %232 = vmatpush1.bf16.msra.mxu0 0
    %233 = vmatprep.subr.bf16.mxu0 0
    %234 = vmatpush1.bf16.msra.mxu0 0
    %235 = vmatprep.subr.bf16.mxu0 0
    %236 = vmatpush1.bf16.msra.mxu0 0
    %237 = vmatprep.subr.bf16.mxu0 0
    %238 = vmatpush1.bf16.msra.mxu0 0
    %239 = vmatprep.subr.bf16.mxu0 0
    %240 = vmatpush1.bf16.msra.mxu0 0
    %241 = vmatprep.subr.bf16.mxu0 0
    %242 = vmatpush1.bf16.msra.mxu0 0
    %243 = vmatprep.subr.bf16.mxu0 0
    %244 = vmatpush1.bf16.msra.mxu0 0
    %245 = vmatprep.subr.bf16.mxu0 0
    %246 = vmatpush1.bf16.msra.mxu0 0
    %247 = vmatprep.subr.bf16.mxu0 0
    %248 = vmatpush1.bf16.msra.mxu0 0
    %249 = vmatprep.subr.bf16.mxu0 0
    %250 = vmatpush1.bf16.msra.mxu0 0
    %251 = vmatprep.subr.bf16.mxu0 0
    %252 = vmatpush1.bf16.msra.mxu0 0
    %253 = vmatprep.mubr.bf16.mxu0 0
    %254 = vmatmul.mubr.bf16.gmra.mrb[0].mxu0 %v219
    %v255 = vpop.f32.mrb[0].mxu0
    %v256 = vadd.f32 %v192, %v255
    %v257 = vpop.f32.mrb[0].mxu0
    %v258 = vpop.f32.mrb[0].mxu0
    %v259 = vpop.f32.mrb[0].mxu0
    %260 = vdwg.mxu0
    %vm261 = vcmask 97280
    %262 = vst.msk [vmem:[#allocation2] sm:$0xff] %vm261, %v256
    // Predicated region
    $region30: #{action_model_forward.1} parent=1 // pred_check
      _
    $region31: #{action_model_forward.1} parent=1 // pred_check_branch
      %264 = sbr.rel (0) target = $region33
    $region32: #{action_model_forward.1} parent=1 // pred_region
      %s266 = ssub.s32 128, 128
      %267 = vsyncadd [#allocation3], %s266
      %s269 = sshll.u32 [#allocation2], 4
      %s270 = int_to_ptr.vmem [resolvable:$true] %s269
      %272 = dma.vmem_to_hbm [thread:$0]  %s270, 128, %s7, [#allocation3]
    $region33: #{action_model_forward.1} parent=1 // pred_fallthru
      _
    // Predicated region
    $region34: #{action_model_forward.1} parent=1 // pred_check
      _
    $region35: #{action_model_forward.1} parent=1 // pred_check_branch
      %274 = sbr.rel (0) target = $region37
    $region36: #{action_model_forward.1} parent=1 // pred_region
      %275 = dma.done [#allocation3], 128
    $region37: #{action_model_forward.1} parent=1 // pred_fallthru
      _
    %276 = vsyncpa [#allocation3], 1

</llo_original>
